<compile_context>
chip_gen: v5e
topology: v5e:2x2
jax: 0.10.0
libtpu: 0.0.40
codegen_flags: <defaults>
</compile_context>

<pallas_src>
import functools

import jax
import jax.numpy as jnp
from jax.experimental import pallas as pl
from jax.experimental.pallas import tpu as pltpu


# ---------------------------------------------------------------------------
# Kernels
# ---------------------------------------------------------------------------
def _spatial_gate_kernel(attn_ref, conv_ref, g_ref, out_ref):
    # attn_ref / conv_ref / out_ref : (tile_r, 128)   g_ref : (128, 128)
    # g is block-diagonal (T blocks of CxC); attn @ g gives, for every lane,
    # the per-token logit  sum_c attn[token, c] * w_sg[c]  already broadcast
    # over that token's C lanes.
    attn = attn_ref[...]
    conv = conv_ref[...]
    sm = jax.nn.sigmoid(
        jnp.dot(attn, g_ref[...], preferred_element_type=jnp.float32)
    )
    out_ref[...] = (attn + conv * sm).astype(out_ref.dtype)


def _channel_apply_kernel(attn_ref, conv_ref, cm_ref, out_ref):
    # attn_ref / conv_ref / out_ref : (1, tile_rb, 128)   cm_ref : (1, 1, 128)
    # cm is the per-sample channel gate, pre-tiled along lanes (T copies of the
    # C-vector), so this is a pure streaming VPU pass.
    out_ref[...] = (
        attn_ref[...] * cm_ref[...] + conv_ref[...]
    ).astype(out_ref.dtype)


# ---------------------------------------------------------------------------
# Helpers
# ---------------------------------------------------------------------------
def _choose_row_tile(n_rows, *, min_tiles=4, cap=2048, floor=8):
    """Pick a row-tile size: a multiple of 8 rows, <= cap (bounded VMEM), and
    aiming for >= min_tiles grid steps (v7x megacore + pipeline warm-up).
    Returns (tile_rows, n_tiles, padded_rows)."""
    tile = (n_rows // max(min_tiles, 1)) // floor * floor
    tile = max(floor, min(tile, cap))
    n_tiles = pl.cdiv(n_rows, tile)
    return tile, n_tiles, n_tiles * tile


@functools.lru_cache(maxsize=None)
def _block_diag_mask(C, T):
    # mask[t*C + c, t'*C + c'] = 1.0 iff t == t'  (token-slot block diagonal).
    return jnp.kron(jnp.eye(T, dtype=jnp.float32),
                    jnp.ones((C, C), dtype=jnp.float32))


# ---------------------------------------------------------------------------
# Wrapper
# ---------------------------------------------------------------------------
def simplified_aim(attn_feat, conv_feat, interaction_type, H, W, params):
    """attn_feat, conv_feat: (B, L, C) with L == H*W."""
    B, L, C = attn_feat.shape
    assert L == H * W
    # Lane-folded layout needs C | 128 and L % (128//C) == 0.
    # TODO(synk): add a non-folded fallback path for channel counts that do not
    # divide 128 (e.g. FDAT dims like 180).
    assert 128 % C == 0, "lane-folded layout requires C to divide 128"
    T = 128 // C
    assert L % T == 0, "lane-folded layout requires L % (128//C) == 0"
    dtype = attn_feat.dtype

    if interaction_type == "spatial_modulates_channel":
        # ---- fold (B, L, C) -> (R, 128), R = B*L/T : a free row-major view ----
        R = (B * L) // T
        attn2 = attn_feat.reshape(R, 128)
        conv2 = conv_feat.reshape(R, 128)

        # Block-diagonal gate matrix: G[t*C+c, t'*C+c'] = w_sg[c] * (t == t').
        # Structural mask is cached; only the tiny per-call scale remains.
        w = params["w_sg"].reshape(C).astype(jnp.float32)
        G = (_block_diag_mask(C, T) * jnp.tile(w, T)[:, None]).astype(dtype)

        tile_r, n_tiles, R_pad = _choose_row_tile(R, min_tiles=4)
        if R_pad != R:
            pad = R_pad - R
            attn2 = jnp.pad(attn2, ((0, pad), (0, 0)))
            conv2 = jnp.pad(conv2, ((0, pad), (0, 0)))

        out2 = pl.pallas_call(
            _spatial_gate_kernel,
            out_shape=jax.ShapeDtypeStruct((R_pad, 128), dtype),
            grid_spec=pltpu.PrefetchScalarGridSpec(
                num_scalar_prefetch=0,
                grid=(n_tiles,),
                in_specs=[
                    pl.BlockSpec((tile_r, 128), lambda i: (i, 0)),
                    pl.BlockSpec((tile_r, 128), lambda i: (i, 0)),
                    pl.BlockSpec((128, 128), lambda i: (0, 0)),
                ],
                out_specs=pl.BlockSpec((tile_r, 128), lambda i: (i, 0)),
            ),
            compiler_params=pltpu.CompilerParams(
                dimension_semantics=("parallel",),
            ),
        )(attn2, conv2, G)
        return out2[:R].reshape(B, L, C)

    else:  # "channel_modulates_spatial"
        # ---- tiny squeeze/excite gate, hoisted out of the streaming kernel ----
        # AdaptiveAvgPool2d(1) -> 1x1 conv -> exact GELU -> 1x1 conv -> sigmoid.
        # This re-reads conv_feat once (+33% HBM traffic vs. an impossible fully
        # fused single pass) but keeps the main kernel's VMEM footprint bounded.
        pooled = jnp.mean(conv_feat.astype(jnp.float32), axis=1)      # (B, C)
        h = jax.nn.gelu(pooled @ params["w_cg1"].astype(jnp.float32),
                        approximate=False)                            # (B, Cr)
        cm = jax.nn.sigmoid(h @ params["w_cg2"].astype(jnp.float32))  # (B, C)
        # Pre-tile along lanes so lane t*C + c carries cm[b, c].
        cm_t = jnp.tile(cm, (1, T)).reshape(B, 1, 128).astype(dtype)  # (B,1,128)

        # ---- fold (B, L, C) -> (B, Rb, 128), Rb = L*C/128 : free view ----
        Rb = (L * C) // 128
        attn3 = attn_feat.reshape(B, Rb, 128)
        conv3 = conv_feat.reshape(B, Rb, 128)

        # >= 4 total grid steps (B * n_rb) so both v7x TensorCores stay busy.
        min_tiles_rb = max(1, -(-4 // B))
        tile_rb, n_rb, Rb_pad = _choose_row_tile(Rb, min_tiles=min_tiles_rb)
        if Rb_pad != Rb:
            pad = Rb_pad - Rb
            attn3 = jnp.pad(attn3, ((0, 0), (0, pad), (0, 0)))
            conv3 = jnp.pad(conv3, ((0, 0), (0, pad), (0, 0)))

        out3 = pl.pallas_call(
            _channel_apply_kernel,
            out_shape=jax.ShapeDtypeStruct((B, Rb_pad, 128), dtype),
            grid_spec=pltpu.PrefetchScalarGridSpec(
                num_scalar_prefetch=0,
                grid=(B, n_rb),
                in_specs=[
                    pl.BlockSpec((1, tile_rb, 128), lambda b, r: (b, r, 0)),
                    pl.BlockSpec((1, tile_rb, 128), lambda b, r: (b, r, 0)),
                    pl.BlockSpec((1, 1, 128), lambda b, r: (b, 0, 0)),
                ],
                out_specs=pl.BlockSpec((1, tile_rb, 128), lambda b, r: (b, r, 0)),
            ),
            compiler_params=pltpu.CompilerParams(
                dimension_semantics=("parallel", "parallel"),
            ),
        )(attn3, conv3, cm_t)
        return out3[:, :Rb].reshape(B, L, C)


# ---------------------------------------------------------------------------
# Pure-JAX reference (for correctness check)
# ---------------------------------------------------------------------------
def simplified_aim_ref(attn_feat, conv_feat, interaction_type, H, W, params):
    if interaction_type == "spatial_modulates_channel":
        w_sg = params["w_sg"]                                     # (1, C)
        sm = jax.nn.sigmoid(
            jnp.sum(attn_feat * w_sg[None, :, :], axis=-1, keepdims=True)
        )
        return attn_feat + conv_feat * sm
    else:
        w1, w2 = params["w_cg1"], params["w_cg2"]
        pooled = jnp.mean(conv_feat, axis=1)                      # (B, C)
        h = jax.nn.gelu(pooled @ w1, approximate=False)
        cm = jax.nn.sigmoid(h @ w2)                               # (B, C)
        return attn_feat * cm[:, None, :] + conv_feat


# ---------------------------------------------------------------------------
if __name__ == "__main__":
    B, C, H, W = 2, 32, 16, 16
    L = H * W
    reduction_ratio = 8
    Cr = C // reduction_ratio

    key = jax.random.PRNGKey(0)
    k_a, k_c, k_sg, k_w1, k_w2 = jax.random.split(key, 5)

    attn_feat = jax.random.normal(k_a, (B, L, C), dtype=jnp.float32)
    conv_feat = jax.random.normal(k_c, (B, L, C), dtype=jnp.float32)

    # 1x1-conv weights flattened to matmul form.
    params = {
        # Conv2d(C, 1, 1, bias=False).weight (1, C, 1, 1) -> (1, C)
        "w_sg": 0.02 * jax.random.normal(k_sg, (1, C), dtype=jnp.float32),
        # Conv2d(C, C//r, 1, bias=False).weight (C//r, C, 1, 1) -> transposed (C, C//r)
        "w_cg1": 0.02 * jax.random.normal(k_w1, (C, Cr), dtype=jnp.float32),
        # Conv2d(C//r, C, 1, bias=False).weight (C, C//r, 1, 1) -> transposed (C//r, C)
        "w_cg2": 0.02 * jax.random.normal(k_w2, (Cr, C), dtype=jnp.float32),
    }

    ok = True
    for itype in ("spatial_modulates_channel", "channel_modulates_spatial"):
        out = simplified_aim(attn_feat, conv_feat, itype, H, W, params)
        out = jax.block_until_ready(out)
        ref = simplified_aim_ref(attn_feat, conv_feat, itype, H, W, params)
        if not jnp.allclose(out, ref, atol=1e-5, rtol=1e-5):
            ok = False
            print(f"MISMATCH in branch {itype}: "
                  f"max abs err {float(jnp.max(jnp.abs(out - ref)))}")

    if ok:
        print("KERNEL_OK")
</pallas_src>

<mosaic_0001>
module attributes {stable_mosaic.version = 11 : i64} {
  func.func @_spatial_gate_kernel(%arg0: i32, %arg1: memref<32x128xf32, #tpu.memory_space<vmem>>, %arg2: memref<32x128xf32, #tpu.memory_space<vmem>>, %arg3: memref<128x128xf32, #tpu.memory_space<vmem>>, %arg4: memref<32x128xf32, #tpu.memory_space<vmem>>) attributes {dimension_semantics = [#tpu.dimension_semantics<parallel>], iteration_bounds = array<i64: 4>, scalar_prefetch = 0 : i64, scratch_operands = 0 : i64, tpu.core_type = #tpu.core_type<tc>, window_params = [{transform_indices = @transform_0, window_bounds = array<i64: 32, 128>}, {transform_indices = @transform_1, window_bounds = array<i64: 32, 128>}, {pipeline_mode = #tpu.pipeline_mode<synchronous>, transform_indices = @transform_2, window_bounds = array<i64: 128, 128>}, {transform_indices = @transform_3, window_bounds = array<i64: 32, 128>}]} {
    %c0 = arith.constant 0 : index
    %c0_0 = arith.constant 0 : index
    %0 = vector.load %arg1[%c0, %c0_0] : memref<32x128xf32, #tpu.memory_space<vmem>>, vector<32x128xf32>
    %c0_1 = arith.constant 0 : index
    %c0_2 = arith.constant 0 : index
    %1 = vector.load %arg2[%c0_1, %c0_2] : memref<32x128xf32, #tpu.memory_space<vmem>>, vector<32x128xf32>
    %c0_3 = arith.constant 0 : index
    %c0_4 = arith.constant 0 : index
    %2 = vector.load %arg3[%c0_3, %c0_4] : memref<128x128xf32, #tpu.memory_space<vmem>>, vector<128x128xf32>
    %cst = arith.constant dense<0.000000e+00> : vector<32x128xf32>
    %3 = tpu.matmul %0, %2, %cst {dimension_numbers = #tpu.dot_dimension_numbers<[1], [0], [0], [1], [0, 0, 1, 1], [], []>} : vector<32x128xf32>, vector<128x128xf32>, vector<32x128xf32> -> vector<32x128xf32>
    %4 = arith.negf %3 : vector<32x128xf32>
    %5 = math.exp %4 : vector<32x128xf32>
    %cst_5 = arith.constant 1.000000e+00 : f32
    %6 = vector.broadcast %cst_5 : f32 to vector<32x128xf32>
    %7 = arith.addf %6, %5 : vector<32x128xf32>
    %8 = arith.divf %6, %7 : vector<32x128xf32>
    %9 = arith.mulf %1, %8 : vector<32x128xf32>
    %10 = arith.addf %0, %9 : vector<32x128xf32>
    %c0_6 = arith.constant 0 : index
    %c0_7 = arith.constant 0 : index
    %11 = vector.load %arg4[%c0_6, %c0_7] : memref<32x128xf32, #tpu.memory_space<vmem>>, vector<32x128xf32>
    tpu.vector_store %arg4[%c0_6, %c0_7], %10 {strides = array<i32>} : memref<32x128xf32, #tpu.memory_space<vmem>>, vector<32x128xf32>,
    return
  }
  func.func @transform_0(%arg0: i32) -> (i32, i32) {
    %c0_i32 = arith.constant 0 : i32
    %c0_i32_0 = arith.constant 0 : i32
    return %arg0, %c0_i32 : i32, i32
  }
  func.func @transform_1(%arg0: i32) -> (i32, i32) {
    %c0_i32 = arith.constant 0 : i32
    %c0_i32_0 = arith.constant 0 : i32
    return %arg0, %c0_i32 : i32, i32
  }
  func.func @transform_2(%arg0: i32) -> (i32, i32) {
    %c0_i32 = arith.constant 0 : i32
    %c0_i32_0 = arith.constant 0 : i32
    %c0_i32_1 = arith.constant 0 : i32
    return %c0_i32, %c0_i32_0 : i32, i32
  }
  func.func @transform_3(%arg0: i32) -> (i32, i32) {
    %c0_i32 = arith.constant 0 : i32
    %c0_i32_0 = arith.constant 0 : i32
    return %arg0, %c0_i32 : i32, i32
  }
}

</mosaic_0001>

<llo_original>
// kernel: tpu_custom_call.1
$region0: #{tpu_custom_call.1}
  #allocation0 [shape = 'u32[]', space=smem, size = 0x4, offset = 0x4, fixed_abs, tag = 'smem constant byte address 0x4 - core index']
  #allocation1 [shape = 'u32[72,128]{1,0:T(1,128)}', space=vmem, size = 0x9000, scoped, tag = 'internal scratch']
  %s0 = inlined_call_operand.hbm [shape: f32[128,128], index: 0, kind: input, shape index: {}]
  %s1 = inlined_call_operand.hbm [shape: f32[128,128], index: 1, kind: input, shape index: {}]
  %s2 = inlined_call_operand.hbm [shape: f32[128,128], index: 2, kind: input, shape index: {}]
  %s3 = inlined_call_operand.hbm [shape: f32[128,128], index: 3, kind: output, shape index: {}]
  %s4 = sld [smem:[#allocation0]]
  $region57: #{tpu_custom_call.1} parent=0
    _
  %s6 = ssub.s32 1, %s4
  %s7 = scalar_select 0, %s6, %s4
  $region1: #{tpu_custom_call.1} parent=0
    #allocation2 [shape = 'u8[32768]{0}', space=vmem, size = 0x8000, scoped, tag = 'input window, operand 0']
    #allocation3 [shape = 's32[2]{0}', space=sflag, size = 0x8, scoped, tag = 'scoped memory for tpu_custom_call.1']
    #allocation4 [shape = 's32[2]{0}', space=sflag, size = 0x8, scoped, tag = 'scoped memory for tpu_custom_call.1']
    #allocation5 [shape = 'u8[32768]{0}', space=vmem, size = 0x8000, scoped, tag = 'input window, operand 1']
    #allocation6 [shape = 's32[2]{0}', space=sflag, size = 0x8, scoped, tag = 'scoped memory for tpu_custom_call.1']
    #allocation7 [shape = 'u8[65536]{0}', space=vmem, size = 0x10000, scoped, tag = 'input window, operand 2, single buffered']
    #allocation8 [shape = 'u8[32768]{0}', space=vmem, size = 0x8000, scoped, tag = 'output window, operand 0']
    %8 = vsyncpa [#allocation3], 0
    %s9 = scalar_lea.sflag [#allocation3], 1
    %10 = vsyncpa %s9, 0
    %11 = vsyncpa [#allocation6], 0
    %s12 = scalar_lea.sflag [#allocation6], 1
    %13 = vsyncpa %s12, 0
    %14 = vsyncpa [#allocation4], 0
    %s15 = scalar_lea.sflag [#allocation4], 1
    %16 = vsyncpa %s15, 0
    loop: start=0, step=1, limit=6
    $region2: #{tpu_custom_call.1} parent=1 // loop_pre_header
      _
    $region3: #{tpu_custom_call.1} parent=1 // loop_header
      %s18 = sphi 0, %s22
      %p19 = scmp.ge.s32.totalorder %s18, 6
      %s28 = sphi 0, %s30
      %s31 = sphi 0, %s28
      %s32 = sphi 0, %s31
      %s48 = sphi 0, %s32
      %s54 = sphi 0, %s56
      %s57 = sphi 0, %s54
      %s58 = sphi 0, %s57
      %s74 = sphi 0, %s58
      %s78 = sphi 0, %s78
      %s80 = sphi 0, %s78
      %s81 = sphi 0, %s80
      %s95 = sphi 0, %s81
      %s101 = sphi 0, %s103
      %s104 = sphi 0, %s101
      %s105 = sphi 0, %s104
      %s121 = sphi 0, %s105
    $region4: #{tpu_custom_call.1} parent=1 // loop_header_branch
      %21 = sbr.rel (%p19) target = $region8
    $region5: #{tpu_custom_call.1} parent=1 // loop_body
      %s23 = ssub.s32 %s18, 1
      %s24 = ssub.s32 %s18, 2
      %s25 = sadd.s32 %s18, 1
      %s26 = ssub.s32 %s18, %s25
      %p27 = scmp.eq.s32.totalorder %s26, 0
      %s29 = sadd.s32 %s28, 1
      %s30 = scalar_select %p27, %s28, %s29
      %p33 = pneg %p27
      %p34 = scmp.eq.s32.totalorder %s18, 3
      %p35 = por %p33, %p34
      %p36 = scmp.ne.s32.totalorder %s28, %s31
      %p37 = scmp.eq.s32.totalorder %s18, 0
      %p38 = por %p36, %p37
      %p39 = scmp.ne.s32.totalorder %s28, %s31
      %p40 = scmp.eq.s32.totalorder %s23, 3
      %p41 = por %p39, %p40
      %p42 = scmp.ne.s32.totalorder %s31, %s32
      %p43 = scmp.eq.s32.totalorder %s23, 0
      %p44 = por %p42, %p43
      %p45 = scmp.ne.s32.totalorder %s31, %s32
      %p46 = scmp.eq.s32.totalorder %s24, 3
      %p47 = por %p45, %p46
      %p49 = scmp.ne.s32.totalorder %s32, %s48
      %p50 = scmp.eq.s32.totalorder %s24, 0
      %p51 = por %p49, %p50
      %s52 = ssub.s32 %s18, %s25
      %p53 = scmp.eq.s32.totalorder %s52, 0
      %s55 = sadd.s32 %s54, 1
      %s56 = scalar_select %p53, %s54, %s55
      %p59 = pneg %p53
      %p60 = scmp.eq.s32.totalorder %s18, 3
      %p61 = por %p59, %p60
      %p62 = scmp.ne.s32.totalorder %s54, %s57
      %p63 = scmp.eq.s32.totalorder %s18, 0
      %p64 = por %p62, %p63
      %p65 = scmp.ne.s32.totalorder %s54, %s57
      %p66 = scmp.eq.s32.totalorder %s23, 3
      %p67 = por %p65, %p66
      %p68 = scmp.ne.s32.totalorder %s57, %s58
      %p69 = scmp.eq.s32.totalorder %s23, 0
      %p70 = por %p68, %p69
      %p71 = scmp.ne.s32.totalorder %s57, %s58
      %p72 = scmp.eq.s32.totalorder %s24, 3
      %p73 = por %p71, %p72
      %p75 = scmp.ne.s32.totalorder %s58, %s74
      %p76 = scmp.eq.s32.totalorder %s24, 0
      %p77 = por %p75, %p76
      %s79 = sadd.s32 %s78, 1
      %p82 = scmp.eq.s32.totalorder %s18, 3
      %p83 = scmp.ne.s32.totalorder %s78, %s80
      %p84 = scmp.eq.s32.totalorder %s18, 0
      %p85 = por %p83, %p84
      %p86 = scmp.ne.s32.totalorder %s78, %s80
      %p87 = scmp.eq.s32.totalorder %s23, 3
      %p88 = por %p86, %p87
      %p89 = scmp.ne.s32.totalorder %s80, %s81
      %p90 = scmp.eq.s32.totalorder %s23, 0
      %p91 = por %p89, %p90
      %p92 = scmp.ne.s32.totalorder %s80, %s81
      %p93 = scmp.eq.s32.totalorder %s24, 3
      %p94 = por %p92, %p93
      %p96 = scmp.ne.s32.totalorder %s81, %s95
      %p97 = scmp.eq.s32.totalorder %s24, 0
      %p98 = por %p96, %p97
      %s99 = ssub.s32 %s18, %s25
      %p100 = scmp.eq.s32.totalorder %s99, 0
      %s102 = sadd.s32 %s101, 1
      %s103 = scalar_select %p100, %s101, %s102
      %p106 = pneg %p100
      %p107 = scmp.eq.s32.totalorder %s18, 3
      %p108 = por %p106, %p107
      %p109 = scmp.ne.s32.totalorder %s101, %s104
      %p110 = scmp.eq.s32.totalorder %s18, 0
      %p111 = por %p109, %p110
      %p112 = scmp.ne.s32.totalorder %s101, %s104
      %p113 = scmp.eq.s32.totalorder %s23, 3
      %p114 = por %p112, %p113
      %p115 = scmp.ne.s32.totalorder %s104, %s105
      %p116 = scmp.eq.s32.totalorder %s23, 0
      %p117 = por %p115, %p116
      %p118 = scmp.ne.s32.totalorder %s104, %s105
      %p119 = scmp.eq.s32.totalorder %s24, 3
      %p120 = por %p118, %p119
      %p122 = scmp.ne.s32.totalorder %s105, %s121
      %p123 = scmp.eq.s32.totalorder %s24, 0
      %p124 = por %p122, %p123
      %p125 = scmp.le.s32.totalorder 1, %s18
      %p126 = scmp.lt.s32.totalorder %s18, 5
      %p127 = pnand %p125, %p126
      %p128 = pneg %p127
      // Predicated region
      $region9: #{tpu_custom_call.1} parent=5 // pred_check
        _
      $region10: #{tpu_custom_call.1} parent=5 // pred_check_branch
        %130 = sbr.rel (%p127) target = $region12
      $region11: #{tpu_custom_call.1} parent=5 // pred_region
        %s131 = ssub.s32 %s18, 1
        // Predicated region
        $region13: #{tpu_custom_call.1} parent=11 // pred_check
          %p132 = pneg %p91
        $region14: #{tpu_custom_call.1} parent=11 // pred_check_branch
          %134 = sbr.rel (%p132) target = $region16
        $region15: #{tpu_custom_call.1} parent=11 // pred_region
          %136 = vsyncadd [#allocation6], 0
          %s137 = sshll.u32 %s2, 4
          %s138 = int_to_ptr.hbm [resolvable:$true] %s137
          %s139 = sshll.u32 [#allocation7], 4
          %s140 = int_to_ptr.vmem [resolvable:$true] %s139
          %145 = dma.hbm_to_vmem [thread:$0]  %s138, 2048, %s140, [#allocation6], 128, 128, 8
        $region16: #{tpu_custom_call.1} parent=11 // pred_fallthru
          _
      $region12: #{tpu_custom_call.1} parent=5 // pred_fallthru
        _
      %p146 = scmp.lt.s32.totalorder %s18, 4
      // Predicated region
      $region17: #{tpu_custom_call.1} parent=5 // pred_check
        %p147 = pneg %p146
      $region18: #{tpu_custom_call.1} parent=5 // pred_check_branch
        %149 = sbr.rel (%p147) target = $region20
      $region19: #{tpu_custom_call.1} parent=5 // pred_region
        // Predicated region
        $region21: #{tpu_custom_call.1} parent=19 // pred_check
          %p150 = pneg %p38
        $region22: #{tpu_custom_call.1} parent=19 // pred_check_branch
          %152 = sbr.rel (%p150) target = $region24
        $region23: #{tpu_custom_call.1} parent=19 // pred_region
          %s153 = sand.u32 %s28, 1
          %s154 = scalar_lea.sflag [#allocation3], %s153
          %s155 = sand.u32 %s28, 1
          %s156 = smul.addr %s155, 32
          %s157 = scalar_lea.vmem [#allocation2], %s156
          %s158 = smul.u32 4, %s18
          %160 = vsyncadd %s154, 0
          %s161 = smul.addr %s158, 8
          %s162 = scalar_lea.hbm %s0, %s161
          %s163 = sshll.u32 %s162, 4
          %s164 = int_to_ptr.hbm [resolvable:$true] %s163
          %s165 = sshll.u32 %s157, 4
          %s166 = int_to_ptr.vmem [resolvable:$true] %s165
          %171 = dma.hbm_to_vmem [thread:$0]  %s164, 512, %s166, %s154, 128, 128, 8
        $region24: #{tpu_custom_call.1} parent=19 // pred_fallthru
          _
        // Predicated region
        $region25: #{tpu_custom_call.1} parent=19 // pred_check
          %p172 = pneg %p64
        $region26: #{tpu_custom_call.1} parent=19 // pred_check_branch
          %174 = sbr.rel (%p172) target = $region28
        $region27: #{tpu_custom_call.1} parent=19 // pred_region
          %s175 = sand.u32 %s18, 1
          %s176 = scalar_lea.sflag [#allocation6], %s175
          %s177 = sand.u32 %s54, 1
          %s178 = smul.addr %s177, 32
          %s179 = scalar_lea.vmem [#allocation5], %s178
          %s180 = smul.u32 4, %s18
          %182 = vsyncadd %s176, 0
          %s183 = smul.addr %s180, 8
          %s184 = scalar_lea.hbm %s1, %s183
          %s185 = sshll.u32 %s184, 4
          %s186 = int_to_ptr.hbm [resolvable:$true] %s185
          %s187 = sshll.u32 %s179, 4
          %s188 = int_to_ptr.vmem [resolvable:$true] %s187
          %193 = dma.hbm_to_vmem [thread:$0]  %s186, 512, %s188, %s176, 128, 128, 8
        $region28: #{tpu_custom_call.1} parent=19 // pred_fallthru
          _
      $region20: #{tpu_custom_call.1} parent=5 // pred_fallthru
        _
      %p194 = scmp.le.s32.totalorder 1, %s18
      %p195 = scmp.lt.s32.totalorder %s18, 5
      %p196 = pnand %p194, %p195
      %p197 = pneg %p196
      // Predicated region
      $region29: #{tpu_custom_call.1} parent=5 // pred_check
        _
      $region30: #{tpu_custom_call.1} parent=5 // pred_check_branch
        %199 = sbr.rel (%p196) target = $region32
      $region31: #{tpu_custom_call.1} parent=5 // pred_region
        %s200 = ssub.s32 %s18, 1
        %s201 = sand.u32 %s31, 1
        %s202 = scalar_lea.sflag [#allocation3], %s201
        %s203 = sand.u32 %s31, 1
        %s204 = smul.addr %s203, 32
        %s205 = scalar_lea.vmem [#allocation2], %s204
        // Predicated region
        $region33: #{tpu_custom_call.1} parent=31 // pred_check
          %p206 = pneg %p44
        $region34: #{tpu_custom_call.1} parent=31 // pred_check_branch
          %208 = sbr.rel (%p206) target = $region36
        $region35: #{tpu_custom_call.1} parent=31 // pred_region
          %210 = dma.done %s202, 512
        $region36: #{tpu_custom_call.1} parent=31 // pred_fallthru
          _
        %s211 = sand.u32 %s23, 1
        %s212 = scalar_lea.sflag [#allocation6], %s211
        %s213 = sand.u32 %s57, 1
        %s214 = smul.addr %s213, 32
        %s215 = scalar_lea.vmem [#allocation5], %s214
        // Predicated region
        $region37: #{tpu_custom_call.1} parent=31 // pred_check
          %p216 = pneg %p70
        $region38: #{tpu_custom_call.1} parent=31 // pred_check_branch
          %218 = sbr.rel (%p216) target = $region40
        $region39: #{tpu_custom_call.1} parent=31 // pred_region
          %220 = dma.done %s212, 512
        $region40: #{tpu_custom_call.1} parent=31 // pred_fallthru
          _
        // Predicated region
        $region41: #{tpu_custom_call.1} parent=31 // pred_check
          %p221 = pneg %p91
        $region42: #{tpu_custom_call.1} parent=31 // pred_check_branch
          %223 = sbr.rel (%p221) target = $region44
        $region43: #{tpu_custom_call.1} parent=31 // pred_region
          %225 = dma.done [#allocation6], 2048
        $region44: #{tpu_custom_call.1} parent=31 // pred_fallthru
          _
        %s226 = sand.u32 %s31, 1
        %s227 = scalar_lea.sflag [#allocation3], %s226
        %s228 = sand.u32 %s31, 1
        %s229 = smul.addr %s228, 32
        %s230 = scalar_lea.vmem [#allocation2], %s229
        %p231 = pneg %p44
        %p232 = pneg %p41
        %s233 = sand.u32 %s23, 1
        %s234 = scalar_lea.sflag [#allocation6], %s233
        %s235 = sand.u32 %s57, 1
        %s236 = smul.addr %s235, 32
        %s237 = scalar_lea.vmem [#allocation5], %s236
        %p238 = pneg %p70
        %p239 = pneg %p67
        %p240 = pneg %p91
        %p241 = pneg %p88
        %p242 = pneg %p117
        %p243 = pneg %p114
        %s244 = sand.u32 %s104, 1
        %s245 = scalar_lea.sflag [#allocation4], %s244
        %s246 = sand.u32 %s104, 1
        %s247 = smul.addr %s246, 32
        %s248 = scalar_lea.vmem [#allocation8], %s247
        %s249 = smul.u32 4, %s23
        %s250 = smul.u32 4, %s23
        %s251 = smul.u32 4, %s23
        %v252 = vld [vmem:[%s205] sm:$0xff]
        %v253 = vld [vmem:[%s205 + $0x8] sm:$0xff]
        %v254 = vld [vmem:[%s205 + $0x10] sm:$0xff]
        %v255 = vld [vmem:[%s205 + $0x18] sm:$0xff]
        %v256 = vld [vmem:[%s215] sm:$0xff]
        %v257 = vld [vmem:[%s215 + $0x8] sm:$0xff]
        %v258 = vld [vmem:[%s215 + $0x10] sm:$0xff]
        %v259 = vld [vmem:[%s215 + $0x18] sm:$0xff]
        %v260 = vld [vmem:[#allocation7] sm:$0xff]
        %v261 = vld [vmem:[#allocation7 + $0x8] sm:$0xff]
        %v262 = vld [vmem:[#allocation7 + $0x10] sm:$0xff]
        %v263 = vld [vmem:[#allocation7 + $0x18] sm:$0xff]
        %v264 = vld [vmem:[#allocation7 + $0x20] sm:$0xff]
        %v265 = vld [vmem:[#allocation7 + $0x28] sm:$0xff]
        %v266 = vld [vmem:[#allocation7 + $0x30] sm:$0xff]
        %v267 = vld [vmem:[#allocation7 + $0x38] sm:$0xff]
        %v268 = vld [vmem:[#allocation7 + $0x40] sm:$0xff]
        %v269 = vld [vmem:[#allocation7 + $0x48] sm:$0xff]
        %v270 = vld [vmem:[#allocation7 + $0x50] sm:$0xff]
        %v271 = vld [vmem:[#allocation7 + $0x58] sm:$0xff]
        %v272 = vld [vmem:[#allocation7 + $0x60] sm:$0xff]
        %v273 = vld [vmem:[#allocation7 + $0x68] sm:$0xff]
        %v274 = vld [vmem:[#allocation7 + $0x70] sm:$0xff]
        %v275 = vld [vmem:[#allocation7 + $0x78] sm:$0xff]
        %276 = vmatpush.msra.mxu0 %v275
        %277 = vmatpush.msra.mxu0 %v274
        %278 = vmatpush.msra.mxu0 %v273
        %279 = vmatpush.msra.mxu0 %v272
        %280 = vmatpush.msra.mxu0 %v271
        %281 = vmatpush.msra.mxu0 %v270
        %282 = vmatpush.msra.mxu0 %v269
        %283 = vmatpush.msra.mxu0 %v268
        %284 = vmatpush.msra.mxu0 %v267
        %285 = vmatpush.msra.mxu0 %v266
        %286 = vmatpush.msra.mxu0 %v265
        %287 = vmatpush.msra.mxu0 %v264
        %288 = vmatpush.msra.mxu0 %v263
        %289 = vmatpush.msra.mxu0 %v262
        %290 = vmatpush.msra.mxu0 %v261
        %291 = vmatpush.msra.mxu0 %v260
        %292 = vmatmul.f32.gmra.mxu0 %v252
        %v293 = vpop.f32.mrf.mxu0
        %v294 = vadd.f32 0.0, %v293
        %295 = vmatmul.f32.gmra.mxu0 %v253
        %v296 = vpop.f32.mrf.mxu0
        %v297 = vadd.f32 0.0, %v296
        %298 = vmatmul.f32.gmra.mxu0 %v254
        %v299 = vpop.f32.mrf.mxu0
        %v300 = vadd.f32 0.0, %v299
        %301 = vmatmul.f32.gmra.mxu0 %v255
        %v302 = vpop.f32.mrf.mxu0
        %v303 = vadd.f32 0.0, %v302
        %304 = vdwg.mxu0
        %v305 = vxor.u32 %v294, 2147483648
        %v306 = vxor.u32 %v297, 2147483648
        %v307 = vxor.u32 %v300, 2147483648
        %v308 = vxor.u32 %v303, 2147483648
        %v309 = vmul.f32 %v305, 1.442695
        %v310 = vpow.pop %v309
        %v311 = vmul.f32 %v306, 1.442695
        %v312 = vpow.pop %v311
        %v313 = vmul.f32 %v307, 1.442695
        %v314 = vpow.pop %v313
        %v315 = vmul.f32 %v308, 1.442695
        %v316 = vpow.pop %v315
        %v317 = vadd.f32 %v310, 1.0
        %v318 = vadd.f32 %v312, 1.0
        %v319 = vadd.f32 %v314, 1.0
        %v320 = vadd.f32 %v316, 1.0
        %v321 = vrcp.pop %v317
        %v322 = vmul.f32 %v317, %v321
        %v323 = vsub.f32 1.0, %v322
        %v324 = vmul.f32 %v321, %v323
        %v325 = vadd.f32 %v321, %v324
        %vm326 = vweird.f32 %v317
        %vm327 = vweird.f32 %v321
        %vm328 = vmor %vm326, %vm327
        %v329 = vsel %vm328, %v321, %v325
        %v330 = vand.u32 2147483647, %v317
        %vm331 = vcmp.eq.f32.partialorder %v330, 8.507059e+37
        %v332 = vand.u32 %v317, 2147483648
        %v333 = vor.u32 1.1754944e-38, %v332
        %v334 = vsel %vm331, %v333, %v329
        %v335 = vmul.f32 1.0, %v334
        %v336 = vrcp.pop %v318
        %v337 = vmul.f32 %v318, %v336
        %v338 = vsub.f32 1.0, %v337
        %v339 = vmul.f32 %v336, %v338
        %v340 = vadd.f32 %v336, %v339
        %vm341 = vweird.f32 %v318
        %vm342 = vweird.f32 %v336
        %vm343 = vmor %vm341, %vm342
        %v344 = vsel %vm343, %v336, %v340
        %v345 = vand.u32 2147483647, %v318
        %vm346 = vcmp.eq.f32.partialorder %v345, 8.507059e+37
        %v347 = vand.u32 %v318, 2147483648
        %v348 = vor.u32 1.1754944e-38, %v347
        %v349 = vsel %vm346, %v348, %v344
        %v350 = vmul.f32 1.0, %v349
        %v351 = vrcp.pop %v319
        %v352 = vmul.f32 %v319, %v351
        %v353 = vsub.f32 1.0, %v352
        %v354 = vmul.f32 %v351, %v353
        %v355 = vadd.f32 %v351, %v354
        %vm356 = vweird.f32 %v319
        %vm357 = vweird.f32 %v351
        %vm358 = vmor %vm356, %vm357
        %v359 = vsel %vm358, %v351, %v355
        %v360 = vand.u32 2147483647, %v319
        %vm361 = vcmp.eq.f32.partialorder %v360, 8.507059e+37
        %v362 = vand.u32 %v319, 2147483648
        %v363 = vor.u32 1.1754944e-38, %v362
        %v364 = vsel %vm361, %v363, %v359
        %v365 = vmul.f32 1.0, %v364
        %v366 = vrcp.pop %v320
        %v367 = vmul.f32 %v320, %v366
        %v368 = vsub.f32 1.0, %v367
        %v369 = vmul.f32 %v366, %v368
        %v370 = vadd.f32 %v366, %v369
        %vm371 = vweird.f32 %v320
        %vm372 = vweird.f32 %v366
        %vm373 = vmor %vm371, %vm372
        %v374 = vsel %vm373, %v366, %v370
        %v375 = vand.u32 2147483647, %v320
        %vm376 = vcmp.eq.f32.partialorder %v375, 8.507059e+37
        %v377 = vand.u32 %v320, 2147483648
        %v378 = vor.u32 1.1754944e-38, %v377
        %v379 = vsel %vm376, %v378, %v374
        %v380 = vmul.f32 1.0, %v379
        %v381 = vmul.f32 %v256, %v335
        %v382 = vmul.f32 %v257, %v350
        %v383 = vmul.f32 %v258, %v365
        %v384 = vmul.f32 %v259, %v380
        %v385 = vadd.f32 %v252, %v381
        %v386 = vadd.f32 %v253, %v382
        %v387 = vadd.f32 %v254, %v383
        %v388 = vadd.f32 %v255, %v384
        %389 = vst [vmem:[%s248] sm:$0xff] %v385
        %390 = vst [vmem:[%s248 + $0x8] sm:$0xff] %v386
        %391 = vst [vmem:[%s248 + $0x10] sm:$0xff] %v387
        %392 = vst [vmem:[%s248 + $0x18] sm:$0xff] %v388
        %s393 = sand.u32 %s104, 1
        %s394 = scalar_lea.sflag [#allocation4], %s393
        %s395 = sand.u32 %s104, 1
        %s396 = smul.addr %s395, 32
        %s397 = scalar_lea.vmem [#allocation8], %s396
        // Predicated region
        $region45: #{tpu_custom_call.1} parent=31 // pred_check
          %p398 = pneg %p114
        $region46: #{tpu_custom_call.1} parent=31 // pred_check_branch
          %400 = sbr.rel (%p398) target = $region48
        $region47: #{tpu_custom_call.1} parent=31 // pred_region
          %s401 = smul.u32 4, %s23
          %403 = vsyncadd %s394, 0
          %s404 = smul.addr %s401, 8
          %s405 = scalar_lea.hbm %s3, %s404
          %s406 = sshll.u32 %s397, 4
          %s407 = int_to_ptr.vmem [resolvable:$true] %s406
          %s408 = sshll.u32 %s405, 4
          %s409 = int_to_ptr.hbm [resolvable:$true] %s408
          %414 = dma.vmem_to_hbm [thread:$0]  %s407, 512, %s409, %s394, 128, 128, 8
        $region48: #{tpu_custom_call.1} parent=31 // pred_fallthru
          _
      $region32: #{tpu_custom_call.1} parent=5 // pred_fallthru
        _
      %p415 = scmp.le.s32.totalorder 2, %s18
      // Predicated region
      $region49: #{tpu_custom_call.1} parent=5 // pred_check
        %p416 = pneg %p415
      $region50: #{tpu_custom_call.1} parent=5 // pred_check_branch
        %418 = sbr.rel (%p416) target = $region52
      $region51: #{tpu_custom_call.1} parent=5 // pred_region
        %s419 = ssub.s32 %s18, 2
        // Predicated region
        $region53: #{tpu_custom_call.1} parent=51 // pred_check
          %p420 = pneg %p120
        $region54: #{tpu_custom_call.1} parent=51 // pred_check_branch
          %422 = sbr.rel (%p420) target = $region56
        $region55: #{tpu_custom_call.1} parent=51 // pred_region
          %s423 = sand.u32 %s105, 1
          %s424 = scalar_lea.sflag [#allocation4], %s423
          %s425 = sand.u32 %s105, 1
          %s426 = smul.addr %s425, 32
          %s427 = scalar_lea.vmem [#allocation8], %s426
          %429 = dma.done %s424, 512
        $region56: #{tpu_custom_call.1} parent=51 // pred_fallthru
          _
      $region52: #{tpu_custom_call.1} parent=5 // pred_fallthru
        _
    $region6: #{tpu_custom_call.1} parent=1 // loop_footer
      %s22 = sadd.s32 1, %s18
    $region7: #{tpu_custom_call.1} parent=1 // loop_footer_branch
      %17 = sbr.rel target = $region3
    $region8: #{tpu_custom_call.1} parent=1 // loop_exit
      _
    %430 = vsyncpa [#allocation3], 1
    %s431 = scalar_lea.sflag [#allocation3], 1
    %432 = vsyncpa %s431, 1
    %433 = vsyncpa [#allocation6], 1
    %s434 = scalar_lea.sflag [#allocation6], 1
    %435 = vsyncpa %s434, 1
    %436 = vsyncpa [#allocation4], 1
    %s437 = scalar_lea.sflag [#allocation4], 1
    %438 = vsyncpa %s437, 1

</llo_original>
